<compile_context>
chip_gen: v6e
topology: v6e:2x2x1
jax: 0.10.0
libtpu: 0.0.40
codegen_flags: <defaults>
</compile_context>

<pallas_src>
import jax
import jax.numpy as jnp
from jax import lax
from jax.experimental import pallas as pl
from jax.experimental.pallas import tpu as pltpu

_LOG_CLAMP = -100.0   # nn.BCELoss clamps each log term at -100.
_LANES = 128


def _make_kernel(*, tile_rows, valid_rows, tiles_per_split, needs_mask,
                 binary_targets):
    """Per-tile kernel: folds one (tile_rows, 128) slab of pred/target onto
    three resident (8, 128) f32 accumulators living in the (24, 128) output
    block. All keyword args are static Python values baked into the trace."""
    k = tile_rows // 8      # 8-row (one f32 vreg) chunks per tile

    def kernel(pred_ref, target_ref, out_ref):
        s = pl.program_id(1)
        j = pl.program_id(2)
        if needs_mask:
            # Logical (unclamped) first row of this tile within the sample.
            tile_row0 = (s * tiles_per_split + j) * tile_rows

        zero = jnp.zeros((8, _LANES), jnp.float32)

        def chunk_body(c, carry):
            bce_acc, inter_acc, sum_acc = carry
            r0 = pl.multiple_of(c * 8, 8)
            # Cast to f32 only after the (possibly narrow-dtype) chunk is in VMEM.
            p = pred_ref[pl.ds(r0, 8), :].astype(jnp.float32)
            t = target_ref[pl.ds(r0, 8), :].astype(jnp.float32)
            if needs_mask:
                rows = tile_row0 + r0 + lax.broadcasted_iota(
                    jnp.int32, (8, _LANES), 0)
                valid = rows < valid_rows
                p = jnp.where(valid, p, 0.0)   # zeroed p/t contribute exactly 0
                t = jnp.where(valid, t, 0.0)   # to BCE, intersection and sums
            if binary_targets:
                # One EUP log instead of two (exact only for t in {0, 1}).
                bce_pos = jnp.maximum(
                    jnp.log(jnp.where(t >= 0.5, p, 1.0 - p)), _LOG_CLAMP)
            else:
                # General (soft-target) nn.BCELoss formula, un-negated:
                #   t*log(p) + (1-t)*log(1-p) == log1mp + t*(logp - log1mp)
                log_p = jnp.maximum(jnp.log(p), _LOG_CLAMP)
                log_1mp = jnp.maximum(jnp.log(1.0 - p), _LOG_CLAMP)
                bce_pos = log_1mp + t * (log_p - log_1mp)
            return (bce_acc + bce_pos,
                    inter_acc + p * t,
                    sum_acc + (p + t))

        bce_acc, inter_acc, sum_acc = lax.fori_loop(
            0, k, chunk_body, (zero, zero, zero), unroll=min(4, k))

        @pl.when(j == 0)
        def _init():
            out_ref[0:8, :] = bce_acc
            out_ref[8:16, :] = inter_acc
            out_ref[16:24, :] = sum_acc

        @pl.when(j != 0)
        def _accumulate():
            out_ref[0:8, :] += bce_acc
            out_ref[8:16, :] += inter_acc
            out_ref[16:24, :] += sum_acc

    return kernel


def bce_dice_loss(pred, target, *, tile_rows=2048, num_splits=2,
                  binary_targets=False):
    """pred, target: (B, ...) with pred in (0, 1). Returns scalar f32 loss."""
    assert pred.shape == target.shape
    B = pred.shape[0]
    N = 1
    for d in pred.shape[1:]:
        N *= d

    pred_flat = pred.reshape(B, N)
    target_flat = target.reshape(B, N)

    # Lane-dense layout: each sample becomes R rows of 128 lanes.  Reshape of a
    # contiguous array is free -> no extra HBM traffic.
    R = -(-N // _LANES)
    if N % _LANES != 0 or R < 8:
        # TODO(synk): ragged lane tail (N % 128 != 0) / tiny inputs still take a
        # padding copy; the row (sublane) tail is handled in-kernel without one.
        R = max(8, -(-R // 8) * 8)
        pad = R * _LANES - N
        pred_flat = jnp.pad(pred_flat, ((0, 0), (0, pad)))
        target_flat = jnp.pad(target_flat, ((0, 0), (0, pad)))

    pred3 = pred_flat.reshape(B, R, _LANES)
    target3 = target_flat.reshape(B, R, _LANES)

    # --- static tiling decisions --------------------------------------------
    num_splits = max(1, num_splits)
    tile_rows = max(8, (tile_rows // 8) * 8)
    # Cap the tile so the row reduction yields >= num_splits tiles when the
    # sample is big enough (keeps both v7x TensorCores streaming at B == 1).
    split_cap = max(8, ((-(-R // num_splits)) // 8) * 8)
    tr = min(tile_rows, (R // 8) * 8, split_cap)
    total_tiles = -(-R // tr)

    nsplit = max(1, min(num_splits, total_tiles))
    tps = -(-total_tiles // nsplit)        # tiles per split (reduction axis)
    covered = nsplit * tps
    needs_clamp = covered > total_tiles     # some grid steps are fully OOB
    needs_mask = covered * tr != R          # partial / OOB rows must be zeroed

    def in_index(b, s, j):
        idx = s * tps + j
        if needs_clamp:
            idx = jnp.minimum(idx, total_tiles - 1)   # re-read + fully masked
        return (b, idx, 0)

    in_spec = pl.BlockSpec((None, tr, _LANES), in_index)
    out_spec = pl.BlockSpec((None, None, 24, _LANES),
                            lambda b, s, j: (b, s, 0, 0))

    kernel = _make_kernel(tile_rows=tr, valid_rows=R, tiles_per_split=tps,
                          needs_mask=needs_mask, binary_targets=binary_targets)

    elems = B * R * _LANES
    in_bytes = (pred3.size * pred3.dtype.itemsize
                + target3.size * target3.dtype.itemsize)
    cost = pl.CostEstimate(
        flops=10 * elems,
        transcendentals=(1 if binary_targets else 2) * elems,
        bytes_accessed=in_bytes + B * nsplit * 24 * _LANES * 4,
    )

    partials = pl.pallas_call(
        kernel,
        out_shape=jax.ShapeDtypeStruct((B, nsplit, 24, _LANES), jnp.float32),
        grid_spec=pltpu.PrefetchScalarGridSpec(
            num_scalar_prefetch=0,
            grid=(B, nsplit, tps),
            in_specs=[in_spec, in_spec],
            out_specs=out_spec,
        ),
        compiler_params=pltpu.CompilerParams(
            dimension_semantics=("parallel", "parallel", "arbitrary"),
            vmem_limit_bytes=32 * 1024 * 1024,
        ),
        cost_estimate=cost,
    )(pred3, target3)

    # Tiny epilogue over (B, nsplit, 24, 128): the single cross-lane reduction
    # plus the BCE / Dice combination (divides by the true, unpadded B*N).
    bce = -jnp.sum(partials[:, :, 0:8, :]) / jnp.float32(B * N)
    inter = jnp.sum(partials[:, :, 8:16, :], axis=(1, 2, 3))
    pt_sum = jnp.sum(partials[:, :, 16:24, :], axis=(1, 2, 3))
    smooth = 1.0
    dice_score = (2.0 * inter + smooth) / (pt_sum + smooth)
    dice_loss = 1.0 - jnp.sum(dice_score) / jnp.float32(B)
    return bce + dice_loss


def _reference_loss(pred, target):
    # Pure-JAX reference mirroring the PyTorch module (validation only).
    B = pred.shape[0]
    p = pred.reshape(B, -1).astype(jnp.float32)
    t = target.reshape(B, -1).astype(jnp.float32)
    bce = jnp.mean(-(t * jnp.maximum(jnp.log(p), -100.0)
                     + (1.0 - t) * jnp.maximum(jnp.log(1.0 - p), -100.0)))
    smooth = 1.0
    inter = jnp.sum(p * t, axis=1)
    dice_score = (2.0 * inter + smooth) / (jnp.sum(p, axis=1)
                                           + jnp.sum(t, axis=1) + smooth)
    dice_loss = 1.0 - jnp.sum(dice_score) / B
    return bce + dice_loss


if __name__ == "__main__":
    # BceDiceLoss has no learnable parameters (weight=None), nothing to init.
    key = jax.random.PRNGKey(0)

    def check(shape, k, **kwargs):
        k_pred, k_tgt = jax.random.split(k)
        pred = jax.nn.sigmoid(jax.random.normal(k_pred, shape, dtype=jnp.float32))
        target = jax.random.bernoulli(k_tgt, p=0.5, shape=shape).astype(jnp.float32)
        loss = jax.block_until_ready(bce_dice_loss(pred, target, **kwargs))
        ref = jax.block_until_ready(_reference_loss(pred, target))
        assert jnp.isfinite(loss), ("non-finite loss", shape)
        assert abs(float(loss) - float(ref)) < 1e-4, (shape, float(loss), float(ref))

    k1, k2, k3 = jax.random.split(key, 3)
    check((2, 4, 16, 16), k1)                        # aligned: no mask, no pad
    check((2, 13, 8, 16), k2)                        # N=1664: in-kernel row-tail mask
    check((2, 4, 16, 16), k3, binary_targets=True)   # single-log EUP path
    print("KERNEL_OK")
</pallas_src>

<mosaic_0001>
module attributes {stable_mosaic.version = 11 : i64} {
  func.func @kernel(%arg0: i32, %arg1: i32, %arg2: i32, %arg3: memref<1x8x128xf32, #tpu.memory_space<vmem>>, %arg4: memref<1x8x128xf32, #tpu.memory_space<vmem>>, %arg5: memref<1x1x24x128xf32, #tpu.memory_space<vmem>>) attributes {dimension_semantics = [#tpu.dimension_semantics<parallel>, #tpu.dimension_semantics<parallel>, #tpu.dimension_semantics<arbitrary>], iteration_bounds = array<i64: 2, 1, 1>, scalar_prefetch = 0 : i64, scratch_operands = 0 : i64, tpu.core_type = #tpu.core_type<tc>, window_params = [{transform_indices = @transform_0, window_bounds = array<i64: 1, 8, 128>}, {transform_indices = @transform_1, window_bounds = array<i64: 1, 8, 128>}, {transform_indices = @transform_2, window_bounds = array<i64: 1, 1, 24, 128>}]} {
    %cst = arith.constant 0.000000e+00 : f32
    %0 = vector.broadcast %cst : f32 to vector<8x128xf32>
    %c0_i32 = arith.constant 0 : i32
    %c8_i32 = arith.constant 8 : i32
    %1 = arith.muli %c0_i32, %c8_i32 : i32
    %2 = tpu.assume_multiple %1, 8 : i32
    %c0 = arith.constant 0 : index
    %3 = arith.index_cast %2 : i32 to index
    %c0_0 = arith.constant 0 : index
    %4 = vector.load %arg3[%c0, %3, %c0_0] : memref<1x8x128xf32, #tpu.memory_space<vmem>>, vector<1x8x128xf32>
    %5 = vector.shape_cast %4 : vector<1x8x128xf32> to vector<8x128xf32>
    %c0_1 = arith.constant 0 : index
    %6 = arith.index_cast %2 : i32 to index
    %c0_2 = arith.constant 0 : index
    %7 = vector.load %arg4[%c0_1, %6, %c0_2] : memref<1x8x128xf32, #tpu.memory_space<vmem>>, vector<1x8x128xf32>
    %8 = vector.shape_cast %7 : vector<1x8x128xf32> to vector<8x128xf32>
    %9 = math.log %5 : vector<8x128xf32>
    %cst_3 = arith.constant -1.000000e+02 : f32
    %10 = vector.broadcast %cst_3 : f32 to vector<8x128xf32>
    %11 = arith.maximumf %9, %10 : vector<8x128xf32>
    %cst_4 = arith.constant 1.000000e+00 : f32
    %12 = vector.broadcast %cst_4 : f32 to vector<8x128xf32>
    %13 = arith.subf %12, %5 : vector<8x128xf32>
    %14 = math.log %13 : vector<8x128xf32>
    %cst_5 = arith.constant -1.000000e+02 : f32
    %15 = vector.broadcast %cst_5 : f32 to vector<8x128xf32>
    %16 = arith.maximumf %14, %15 : vector<8x128xf32>
    %17 = arith.subf %11, %16 : vector<8x128xf32>
    %18 = arith.mulf %8, %17 : vector<8x128xf32>
    %19 = arith.addf %16, %18 : vector<8x128xf32>
    %20 = arith.addf %0, %19 : vector<8x128xf32>
    %21 = arith.mulf %5, %8 : vector<8x128xf32>
    %22 = arith.addf %0, %21 : vector<8x128xf32>
    %23 = arith.addf %5, %8 : vector<8x128xf32>
    %24 = arith.addf %0, %23 : vector<8x128xf32>
    %c1_i32 = arith.constant 1 : i32
    %c0_i32_6 = arith.constant 0 : i32
    %25 = arith.cmpi eq, %arg2, %c0_i32_6 : i32
    %26 = arith.extui %25 : i1 to i32
    %c0_i32_7 = arith.constant 0 : i32
    %27 = arith.cmpi ne, %26, %c0_i32_7 : i32
    scf.if %27 {
      %c0_10 = arith.constant 0 : index
      %c0_11 = arith.constant 0 : index
      %c0_12 = arith.constant 0 : index
      %c0_13 = arith.constant 0 : index
      %31 = vector.load %arg5[%c0_10, %c0_11, %c0_12, %c0_13] : memref<1x1x24x128xf32, #tpu.memory_space<vmem>>, vector<1x1x8x128xf32>
      %32 = vector.shape_cast %31 : vector<1x1x8x128xf32> to vector<8x128xf32>
      %33 = vector.shape_cast %20 : vector<8x128xf32> to vector<1x1x8x128xf32>
      tpu.vector_store %arg5[%c0_10, %c0_11, %c0_12, %c0_13], %33 {strides = array<i32>} : memref<1x1x24x128xf32, #tpu.memory_space<vmem>>, vector<1x1x8x128xf32>,
      %c0_14 = arith.constant 0 : index
      %c0_15 = arith.constant 0 : index
      %c8 = arith.constant 8 : index
      %c0_16 = arith.constant 0 : index
      %34 = vector.load %arg5[%c0_14, %c0_15, %c8, %c0_16] : memref<1x1x24x128xf32, #tpu.memory_space<vmem>>, vector<1x1x8x128xf32>
      %35 = vector.shape_cast %34 : vector<1x1x8x128xf32> to vector<8x128xf32>
      %36 = vector.shape_cast %22 : vector<8x128xf32> to vector<1x1x8x128xf32>
      tpu.vector_store %arg5[%c0_14, %c0_15, %c8, %c0_16], %36 {strides = array<i32>} : memref<1x1x24x128xf32, #tpu.memory_space<vmem>>, vector<1x1x8x128xf32>,
      %c0_17 = arith.constant 0 : index
      %c0_18 = arith.constant 0 : index
      %c16 = arith.constant 16 : index
      %c0_19 = arith.constant 0 : index
      %37 = vector.load %arg5[%c0_17, %c0_18, %c16, %c0_19] : memref<1x1x24x128xf32, #tpu.memory_space<vmem>>, vector<1x1x8x128xf32>
      %38 = vector.shape_cast %37 : vector<1x1x8x128xf32> to vector<8x128xf32>
      %39 = vector.shape_cast %24 : vector<8x128xf32> to vector<1x1x8x128xf32>
      tpu.vector_store %arg5[%c0_17, %c0_18, %c16, %c0_19], %39 {strides = array<i32>} : memref<1x1x24x128xf32, #tpu.memory_space<vmem>>, vector<1x1x8x128xf32>,
    } else {
    }
    %c0_i32_8 = arith.constant 0 : i32
    %28 = arith.cmpi ne, %arg2, %c0_i32_8 : i32
    %29 = arith.extui %28 : i1 to i32
    %c0_i32_9 = arith.constant 0 : i32
    %30 = arith.cmpi ne, %29, %c0_i32_9 : i32
    scf.if %30 {
      %c0_10 = arith.constant 0 : index
      %c0_11 = arith.constant 0 : index
      %c0_12 = arith.constant 0 : index
      %c0_13 = arith.constant 0 : index
      %31 = vector.load %arg5[%c0_10, %c0_11, %c0_12, %c0_13] : memref<1x1x24x128xf32, #tpu.memory_space<vmem>>, vector<1x1x8x128xf32>
      %32 = vector.shape_cast %31 : vector<1x1x8x128xf32> to vector<8x128xf32>
      %33 = arith.addf %32, %20 : vector<8x128xf32>
      %c0_14 = arith.constant 0 : index
      %c0_15 = arith.constant 0 : index
      %c0_16 = arith.constant 0 : index
      %c0_17 = arith.constant 0 : index
      %34 = vector.load %arg5[%c0_14, %c0_15, %c0_16, %c0_17] : memref<1x1x24x128xf32, #tpu.memory_space<vmem>>, vector<1x1x8x128xf32>
      %35 = vector.shape_cast %34 : vector<1x1x8x128xf32> to vector<8x128xf32>
      %36 = vector.shape_cast %33 : vector<8x128xf32> to vector<1x1x8x128xf32>
      tpu.vector_store %arg5[%c0_14, %c0_15, %c0_16, %c0_17], %36 {strides = array<i32>} : memref<1x1x24x128xf32, #tpu.memory_space<vmem>>, vector<1x1x8x128xf32>,
      %c0_18 = arith.constant 0 : index
      %c0_19 = arith.constant 0 : index
      %c8 = arith.constant 8 : index
      %c0_20 = arith.constant 0 : index
      %37 = vector.load %arg5[%c0_18, %c0_19, %c8, %c0_20] : memref<1x1x24x128xf32, #tpu.memory_space<vmem>>, vector<1x1x8x128xf32>
      %38 = vector.shape_cast %37 : vector<1x1x8x128xf32> to vector<8x128xf32>
      %39 = arith.addf %38, %22 : vector<8x128xf32>
      %c0_21 = arith.constant 0 : index
      %c0_22 = arith.constant 0 : index
      %c8_23 = arith.constant 8 : index
      %c0_24 = arith.constant 0 : index
      %40 = vector.load %arg5[%c0_21, %c0_22, %c8_23, %c0_24] : memref<1x1x24x128xf32, #tpu.memory_space<vmem>>, vector<1x1x8x128xf32>
      %41 = vector.shape_cast %40 : vector<1x1x8x128xf32> to vector<8x128xf32>
      %42 = vector.shape_cast %39 : vector<8x128xf32> to vector<1x1x8x128xf32>
      tpu.vector_store %arg5[%c0_21, %c0_22, %c8_23, %c0_24], %42 {strides = array<i32>} : memref<1x1x24x128xf32, #tpu.memory_space<vmem>>, vector<1x1x8x128xf32>,
      %c0_25 = arith.constant 0 : index
      %c0_26 = arith.constant 0 : index
      %c16 = arith.constant 16 : index
      %c0_27 = arith.constant 0 : index
      %43 = vector.load %arg5[%c0_25, %c0_26, %c16, %c0_27] : memref<1x1x24x128xf32, #tpu.memory_space<vmem>>, vector<1x1x8x128xf32>
      %44 = vector.shape_cast %43 : vector<1x1x8x128xf32> to vector<8x128xf32>
      %45 = arith.addf %44, %24 : vector<8x128xf32>
      %c0_28 = arith.constant 0 : index
      %c0_29 = arith.constant 0 : index
      %c16_30 = arith.constant 16 : index
      %c0_31 = arith.constant 0 : index
      %46 = vector.load %arg5[%c0_28, %c0_29, %c16_30, %c0_31] : memref<1x1x24x128xf32, #tpu.memory_space<vmem>>, vector<1x1x8x128xf32>
      %47 = vector.shape_cast %46 : vector<1x1x8x128xf32> to vector<8x128xf32>
      %48 = vector.shape_cast %45 : vector<8x128xf32> to vector<1x1x8x128xf32>
      tpu.vector_store %arg5[%c0_28, %c0_29, %c16_30, %c0_31], %48 {strides = array<i32>} : memref<1x1x24x128xf32, #tpu.memory_space<vmem>>, vector<1x1x8x128xf32>,
    } else {
    }
    return
  }
  func.func @transform_0(%arg0: i32, %arg1: i32, %arg2: i32) -> (i32, i32, i32) {
    %c1_i32 = arith.constant 1 : i32
    %0 = arith.muli %arg1, %c1_i32 : i32
    %1 = arith.addi %0, %arg2 : i32
    %c0_i32 = arith.constant 0 : i32
    %c0_i32_0 = arith.constant 0 : i32
    return %arg0, %1, %c0_i32 : i32, i32, i32
  }
  func.func @transform_1(%arg0: i32, %arg1: i32, %arg2: i32) -> (i32, i32, i32) {
    %c1_i32 = arith.constant 1 : i32
    %0 = arith.muli %arg1, %c1_i32 : i32
    %1 = arith.addi %0, %arg2 : i32
    %c0_i32 = arith.constant 0 : i32
    %c0_i32_0 = arith.constant 0 : i32
    return %arg0, %1, %c0_i32 : i32, i32, i32
  }
  func.func @transform_2(%arg0: i32, %arg1: i32, %arg2: i32) -> (i32, i32, i32, i32) {
    %c0_i32 = arith.constant 0 : i32
    %c0_i32_0 = arith.constant 0 : i32
    %c0_i32_1 = arith.constant 0 : i32
    return %arg0, %arg1, %c0_i32, %c0_i32_0 : i32, i32, i32, i32
  }
}

</mosaic_0001>

<llo_original>
// kernel: tpu_custom_call.1
$region0: #{tpu_custom_call.1}
  #allocation0 [shape = 'u32[]', space=smem, size = 0x4, offset = 0x4, fixed_abs, tag = 'smem constant byte address 0x4 - core index']
  #allocation1 [shape = 'u32[144,128]{1,0:T(1,128)}', space=vmem, size = 0x12000, scoped, tag = 'internal scratch']
  %s0 = inlined_call_operand.hbm [shape: f32[2,8,128], index: 0, kind: input, shape index: {}]
  %s1 = inlined_call_operand.hbm [shape: f32[2,8,128], index: 1, kind: input, shape index: {}]
  %s2 = inlined_call_operand.hbm [shape: f32[2,1,24,128], index: 2, kind: output, shape index: {}]
  %s3 = sld [smem:[#allocation0]]
  $region57: #{tpu_custom_call.1} parent=0
    _
  %s5 = ssub.s32 1, %s3
  %s6 = scalar_select 0, %s5, %s3
  $region1: #{tpu_custom_call.1} parent=0
    #allocation2 [shape = 'u8[8192]{0}', space=vmem, size = 0x2000, scoped, tag = 'input window, operand 0']
    #allocation3 [shape = 's32[2]{0}', space=sflag, size = 0x8, scoped, tag = 'scoped memory for tpu_custom_call.1']
    #allocation4 [shape = 's32[2]{0}', space=sflag, size = 0x8, scoped, tag = 'scoped memory for tpu_custom_call.1']
    #allocation5 [shape = 'u8[8192]{0}', space=vmem, size = 0x2000, scoped, tag = 'input window, operand 1']
    #allocation6 [shape = 's32[2]{0}', space=sflag, size = 0x8, scoped, tag = 'scoped memory for tpu_custom_call.1']
    #allocation7 [shape = 'u8[24576]{0}', space=vmem, size = 0x6000, scoped, tag = 'output window, operand 0']
    %7 = vsyncpa [#allocation3], 0
    %s8 = scalar_lea.sflag [#allocation3], 1
    %9 = vsyncpa %s8, 0
    %10 = vsyncpa [#allocation6], 0
    %s11 = scalar_lea.sflag [#allocation6], 1
    %12 = vsyncpa %s11, 0
    %13 = vsyncpa [#allocation4], 0
    %s14 = scalar_lea.sflag [#allocation4], 1
    %15 = vsyncpa %s14, 0
    loop: start=0, step=1, limit=4
    $region2: #{tpu_custom_call.1} parent=1 // loop_pre_header
      _
    $region3: #{tpu_custom_call.1} parent=1 // loop_header
      %s17 = sphi 0, %s21
      %p18 = scmp.ge.s32.totalorder %s17, 4
      %s24 = sphi 0, %s43
      %s25 = sphi 0, %s39
      %s26 = sphi 0, %s35
      %s27 = sphi 0, %s24
      %s28 = sphi 0, %s25
      %s29 = sphi 0, %s26
      %s30 = sphi 0, %s27
      %s31 = sphi 0, %s28
      %s32 = sphi 0, %s29
      %s50 = sphi 0, %s52
      %s53 = sphi 0, %s50
      %s54 = sphi 0, %s53
      %s70 = sphi 0, %s54
      %s80 = sphi 0, %s82
      %s83 = sphi 0, %s80
      %s84 = sphi 0, %s83
      %s100 = sphi 0, %s84
      %s108 = sphi 0, %s110
      %s111 = sphi 0, %s108
      %s112 = sphi 0, %s111
      %s128 = sphi 0, %s112
    $region4: #{tpu_custom_call.1} parent=1 // loop_header_branch
      %20 = sbr.rel (%p18) target = $region8
    $region5: #{tpu_custom_call.1} parent=1 // loop_body
      %s22 = ssub.s32 %s17, 1
      %s23 = ssub.s32 %s17, 2
      %s33 = sadd.s32 1, %s26
      %p34 = scmp.ge.s32.totalorder %s33, 1
      %s35 = scalar_select %p34, 0, %s33
      %s36 = sadd.s32 1, %s25
      %s37 = scalar_select %p34, %s36, %s25
      %p38 = scmp.ge.s32.totalorder %s37, 1
      %s39 = scalar_select %p38, 0, %s37
      %s40 = sadd.s32 1, %s24
      %s41 = scalar_select %p38, %s40, %s24
      %p42 = scmp.ge.s32.totalorder %s41, 2
      %s43 = scalar_select %p42, 0, %s41
      %s44 = sadd.s32 %s25, %s26
      %s45 = sadd.s32 %s39, %s35
      %s46 = ssub.s32 %s24, %s43
      %s47 = ssub.s32 %s44, %s45
      %s48 = sor.u32 %s46, %s47
      %p49 = scmp.eq.s32.totalorder %s48, 0
      %s51 = sadd.s32 %s50, 1
      %s52 = scalar_select %p49, %s50, %s51
      %p55 = pneg %p49
      %p56 = scmp.eq.s32.totalorder %s17, 1
      %p57 = por %p55, %p56
      %p58 = scmp.ne.s32.totalorder %s50, %s53
      %p59 = scmp.eq.s32.totalorder %s17, 0
      %p60 = por %p58, %p59
      %p61 = scmp.ne.s32.totalorder %s50, %s53
      %p62 = scmp.eq.s32.totalorder %s22, 1
      %p63 = por %p61, %p62
      %p64 = scmp.ne.s32.totalorder %s53, %s54
      %p65 = scmp.eq.s32.totalorder %s22, 0
      %p66 = por %p64, %p65
      %p67 = scmp.ne.s32.totalorder %s53, %s54
      %p68 = scmp.eq.s32.totalorder %s23, 1
      %p69 = por %p67, %p68
      %p71 = scmp.ne.s32.totalorder %s54, %s70
      %p72 = scmp.eq.s32.totalorder %s23, 0
      %p73 = por %p71, %p72
      %s74 = sadd.s32 %s25, %s26
      %s75 = sadd.s32 %s39, %s35
      %s76 = ssub.s32 %s24, %s43
      %s77 = ssub.s32 %s74, %s75
      %s78 = sor.u32 %s76, %s77
      %p79 = scmp.eq.s32.totalorder %s78, 0
      %s81 = sadd.s32 %s80, 1
      %s82 = scalar_select %p79, %s80, %s81
      %p85 = pneg %p79
      %p86 = scmp.eq.s32.totalorder %s17, 1
      %p87 = por %p85, %p86
      %p88 = scmp.ne.s32.totalorder %s80, %s83
      %p89 = scmp.eq.s32.totalorder %s17, 0
      %p90 = por %p88, %p89
      %p91 = scmp.ne.s32.totalorder %s80, %s83
      %p92 = scmp.eq.s32.totalorder %s22, 1
      %p93 = por %p91, %p92
      %p94 = scmp.ne.s32.totalorder %s83, %s84
      %p95 = scmp.eq.s32.totalorder %s22, 0
      %p96 = por %p94, %p95
      %p97 = scmp.ne.s32.totalorder %s83, %s84
      %p98 = scmp.eq.s32.totalorder %s23, 1
      %p99 = por %p97, %p98
      %p101 = scmp.ne.s32.totalorder %s84, %s100
      %p102 = scmp.eq.s32.totalorder %s23, 0
      %p103 = por %p101, %p102
      %s104 = ssub.s32 %s24, %s43
      %s105 = ssub.s32 %s25, %s39
      %s106 = sor.u32 %s104, %s105
      %p107 = scmp.eq.s32.totalorder %s106, 0
      %s109 = sadd.s32 %s108, 1
      %s110 = scalar_select %p107, %s108, %s109
      %p113 = pneg %p107
      %p114 = scmp.eq.s32.totalorder %s17, 1
      %p115 = por %p113, %p114
      %p116 = scmp.ne.s32.totalorder %s108, %s111
      %p117 = scmp.eq.s32.totalorder %s17, 0
      %p118 = por %p116, %p117
      %p119 = scmp.ne.s32.totalorder %s108, %s111
      %p120 = scmp.eq.s32.totalorder %s22, 1
      %p121 = por %p119, %p120
      %p122 = scmp.ne.s32.totalorder %s111, %s112
      %p123 = scmp.eq.s32.totalorder %s22, 0
      %p124 = por %p122, %p123
      %p125 = scmp.ne.s32.totalorder %s111, %s112
      %p126 = scmp.eq.s32.totalorder %s23, 1
      %p127 = por %p125, %p126
      %p129 = scmp.ne.s32.totalorder %s112, %s128
      %p130 = scmp.eq.s32.totalorder %s23, 0
      %p131 = por %p129, %p130
      %p132 = scmp.le.s32.totalorder 1, %s17
      %p133 = scmp.lt.s32.totalorder %s17, 3
      %p134 = pnand %p132, %p133
      %p135 = pneg %p134
      // Predicated region
      $region9: #{tpu_custom_call.1} parent=5 // pred_check
        _
      $region10: #{tpu_custom_call.1} parent=5 // pred_check_branch
        %137 = sbr.rel (%p134) target = $region12
      $region11: #{tpu_custom_call.1} parent=5 // pred_region
        %s138 = ssub.s32 %s17, 1
      $region12: #{tpu_custom_call.1} parent=5 // pred_fallthru
        _
      %p139 = scmp.lt.s32.totalorder %s17, 2
      // Predicated region
      $region13: #{tpu_custom_call.1} parent=5 // pred_check
        %p140 = pneg %p139
      $region14: #{tpu_custom_call.1} parent=5 // pred_check_branch
        %142 = sbr.rel (%p140) target = $region16
      $region15: #{tpu_custom_call.1} parent=5 // pred_region
        // Predicated region
        $region17: #{tpu_custom_call.1} parent=15 // pred_check
          %p143 = pneg %p60
        $region18: #{tpu_custom_call.1} parent=15 // pred_check_branch
          %145 = sbr.rel (%p143) target = $region20
        $region19: #{tpu_custom_call.1} parent=15 // pred_region
          %s146 = sand.u32 %s50, 1
          %s147 = scalar_lea.sflag [#allocation3], %s146
          %s148 = sand.u32 %s50, 1
          %s149 = smul.addr %s148, 8
          %s150 = scalar_lea.vmem [#allocation2], %s149
          %s151 = sadd.s32 %s25, %s26
          %s153 = ssub.s32 128, 128
          %154 = vsyncadd %s147, %s153
          %s155 = sadd.s32 %s151, %s24
          %s156 = smul.addr %s155, 128
          %s157 = scalar_lea.hbm %s0, %s156
          %s159 = sshll.u32 %s150, 4
          %s160 = int_to_ptr.vmem [resolvable:$true] %s159
          %162 = dma.hbm_to_vmem [thread:$0]  %s157, 128, %s160, %s147
        $region20: #{tpu_custom_call.1} parent=15 // pred_fallthru
          _
        // Predicated region
        $region21: #{tpu_custom_call.1} parent=15 // pred_check
          %p163 = pneg %p90
        $region22: #{tpu_custom_call.1} parent=15 // pred_check_branch
          %165 = sbr.rel (%p163) target = $region24
        $region23: #{tpu_custom_call.1} parent=15 // pred_region
          %s166 = sand.u32 %s80, 1
          %s167 = scalar_lea.sflag [#allocation6], %s166
          %s168 = sand.u32 %s80, 1
          %s169 = smul.addr %s168, 8
          %s170 = scalar_lea.vmem [#allocation5], %s169
          %s171 = sadd.s32 %s25, %s26
          %s173 = ssub.s32 128, 128
          %174 = vsyncadd %s167, %s173
          %s175 = sadd.s32 %s171, %s24
          %s176 = smul.addr %s175, 128
          %s177 = scalar_lea.hbm %s1, %s176
          %s179 = sshll.u32 %s170, 4
          %s180 = int_to_ptr.vmem [resolvable:$true] %s179
          %182 = dma.hbm_to_vmem [thread:$0]  %s177, 128, %s180, %s167
        $region24: #{tpu_custom_call.1} parent=15 // pred_fallthru
          _
      $region16: #{tpu_custom_call.1} parent=5 // pred_fallthru
        _
      %p183 = scmp.le.s32.totalorder 1, %s17
      %p184 = scmp.lt.s32.totalorder %s17, 3
      %p185 = pnand %p183, %p184
      %p186 = pneg %p185
      // Predicated region
      $region25: #{tpu_custom_call.1} parent=5 // pred_check
        _
      $region26: #{tpu_custom_call.1} parent=5 // pred_check_branch
        %188 = sbr.rel (%p185) target = $region28
      $region27: #{tpu_custom_call.1} parent=5 // pred_region
        %s189 = ssub.s32 %s17, 1
        %s190 = sand.u32 %s53, 1
        %s191 = scalar_lea.sflag [#allocation3], %s190
        %s192 = sand.u32 %s53, 1
        %s193 = smul.addr %s192, 8
        %s194 = scalar_lea.vmem [#allocation2], %s193
        // Predicated region
        $region29: #{tpu_custom_call.1} parent=27 // pred_check
          %p195 = pneg %p66
        $region30: #{tpu_custom_call.1} parent=27 // pred_check_branch
          %197 = sbr.rel (%p195) target = $region32
        $region31: #{tpu_custom_call.1} parent=27 // pred_region
          %198 = dma.done %s191, 128
        $region32: #{tpu_custom_call.1} parent=27 // pred_fallthru
          _
        %s199 = sand.u32 %s83, 1
        %s200 = scalar_lea.sflag [#allocation6], %s199
        %s201 = sand.u32 %s83, 1
        %s202 = smul.addr %s201, 8
        %s203 = scalar_lea.vmem [#allocation5], %s202
        // Predicated region
        $region33: #{tpu_custom_call.1} parent=27 // pred_check
          %p204 = pneg %p96
        $region34: #{tpu_custom_call.1} parent=27 // pred_check_branch
          %206 = sbr.rel (%p204) target = $region36
        $region35: #{tpu_custom_call.1} parent=27 // pred_region
          %207 = dma.done %s200, 128
        $region36: #{tpu_custom_call.1} parent=27 // pred_fallthru
          _
        %s208 = sand.u32 %s53, 1
        %s209 = scalar_lea.sflag [#allocation3], %s208
        %s210 = sand.u32 %s53, 1
        %s211 = smul.addr %s210, 8
        %s212 = scalar_lea.vmem [#allocation2], %s211
        %p213 = pneg %p66
        %p214 = pneg %p63
        %s215 = sand.u32 %s83, 1
        %s216 = scalar_lea.sflag [#allocation6], %s215
        %s217 = sand.u32 %s83, 1
        %s218 = smul.addr %s217, 8
        %s219 = scalar_lea.vmem [#allocation5], %s218
        %p220 = pneg %p96
        %p221 = pneg %p93
        %p222 = pneg %p124
        %p223 = pneg %p121
        %s224 = sand.u32 %s111, 1
        %s225 = scalar_lea.sflag [#allocation4], %s224
        %s226 = sand.u32 %s111, 1
        %s227 = smul.addr %s226, 24
        %s228 = scalar_lea.vmem [#allocation7], %s227
        %s229 = sadd.s32 %s28, %s29
        %s230 = sadd.s32 %s28, %s29
        %v231 = vld [vmem:[%s194] sm:$0xff]
        %v232 = vld [vmem:[%s203] sm:$0xff]
        %v233 = vlog2.pop %v231
        %v234 = vmul.f32 %v233, 0.6931472
        %v235 = vmax.f32 %v234, -100.0
        %v236 = vsub.f32 1.0, %v231
        %v237 = vlog2.pop %v236
        %v238 = vmul.f32 %v237, 0.6931472
        %v239 = vmax.f32 %v238, -100.0
        %v240 = vsub.f32 %v235, %v239
        %v241 = vmul.f32 %v232, %v240
        %v242 = vadd.f32 %v239, %v241
        %v243 = vadd.f32 %v242, 0.0
        %v244 = vmul.f32 %v231, %v232
        %v245 = vadd.f32 %v244, 0.0
        %v246 = vadd.f32 %v231, %v232
        %v247 = vadd.f32 %v246, 0.0
        %p248 = scmp.eq.s32.totalorder %s29, 0
        // Predicated region
        $region37: #{tpu_custom_call.1} parent=27 // pred_check
          %p249 = pneg %p248
        $region38: #{tpu_custom_call.1} parent=27 // pred_check_branch
          %251 = sbr.rel (%p249) target = $region40
        $region39: #{tpu_custom_call.1} parent=27 // pred_region
          %252 = vst [vmem:[%s228] sm:$0xff] %v243
          %253 = vst [vmem:[%s228 + $0x8] sm:$0xff] %v245
          %254 = vst [vmem:[%s228 + $0x10] sm:$0xff] %v247
        $region40: #{tpu_custom_call.1} parent=27 // pred_fallthru
          _
        %p255 = scmp.ne.s32.totalorder %s29, 0
        // Predicated region
        $region41: #{tpu_custom_call.1} parent=27 // pred_check
          %p256 = pneg %p255
        $region42: #{tpu_custom_call.1} parent=27 // pred_check_branch
          %258 = sbr.rel (%p256) target = $region44
        $region43: #{tpu_custom_call.1} parent=27 // pred_region
          %v259 = vld [vmem:[%s228] sm:$0xff]
          %v260 = vadd.f32 %v259, %v243
          %261 = vst [vmem:[%s228] sm:$0xff] %v260
          %v262 = vld [vmem:[%s228 + $0x8] sm:$0xff]
          %v263 = vadd.f32 %v262, %v245
          %264 = vst [vmem:[%s228 + $0x8] sm:$0xff] %v263
          %v265 = vld [vmem:[%s228 + $0x10] sm:$0xff]
          %v266 = vadd.f32 %v265, %v247
          %267 = vst [vmem:[%s228 + $0x10] sm:$0xff] %v266
        $region44: #{tpu_custom_call.1} parent=27 // pred_fallthru
          _
        %s268 = sand.u32 %s111, 1
        %s269 = scalar_lea.sflag [#allocation4], %s268
        %s270 = sand.u32 %s111, 1
        %s271 = smul.addr %s270, 24
        %s272 = scalar_lea.vmem [#allocation7], %s271
        // Predicated region
        $region45: #{tpu_custom_call.1} parent=27 // pred_check
          %p273 = pneg %p121
        $region46: #{tpu_custom_call.1} parent=27 // pred_check_branch
          %275 = sbr.rel (%p273) target = $region48
        $region47: #{tpu_custom_call.1} parent=27 // pred_region
          %s277 = ssub.s32 384, 384
          %278 = vsyncadd %s269, %s277
          %s279 = smul.addr %s28, 3
          %s280 = smul.addr %s27, 3
          %s281 = sadd.s32 %s279, %s280
          %s282 = smul.addr %s281, 128
          %s283 = scalar_lea.hbm %s2, %s282
          %s284 = sshll.u32 %s272, 4
          %s285 = int_to_ptr.vmem [resolvable:$true] %s284
          %290 = dma.vmem_to_hbm [thread:$0]  %s285, 384, %s283, %s269, 128, 128, 8
        $region48: #{tpu_custom_call.1} parent=27 // pred_fallthru
          _
      $region28: #{tpu_custom_call.1} parent=5 // pred_fallthru
        _
      %p291 = scmp.le.s32.totalorder 2, %s17
      // Predicated region
      $region49: #{tpu_custom_call.1} parent=5 // pred_check
        %p292 = pneg %p291
      $region50: #{tpu_custom_call.1} parent=5 // pred_check_branch
        %294 = sbr.rel (%p292) target = $region52
      $region51: #{tpu_custom_call.1} parent=5 // pred_region
        %s295 = ssub.s32 %s17, 2
        // Predicated region
        $region53: #{tpu_custom_call.1} parent=51 // pred_check
          %p296 = pneg %p127
        $region54: #{tpu_custom_call.1} parent=51 // pred_check_branch
          %298 = sbr.rel (%p296) target = $region56
        $region55: #{tpu_custom_call.1} parent=51 // pred_region
          %s299 = sand.u32 %s112, 1
          %s300 = scalar_lea.sflag [#allocation4], %s299
          %s301 = sand.u32 %s112, 1
          %s302 = smul.addr %s301, 24
          %s303 = scalar_lea.vmem [#allocation7], %s302
          %304 = dma.done %s300, 384
        $region56: #{tpu_custom_call.1} parent=51 // pred_fallthru
          _
      $region52: #{tpu_custom_call.1} parent=5 // pred_fallthru
        _
    $region6: #{tpu_custom_call.1} parent=1 // loop_footer
      %s21 = sadd.s32 1, %s17
    $region7: #{tpu_custom_call.1} parent=1 // loop_footer_branch
      %16 = sbr.rel target = $region3
    $region8: #{tpu_custom_call.1} parent=1 // loop_exit
      _
    %305 = vsyncpa [#allocation3], 1
    %s306 = scalar_lea.sflag [#allocation3], 1
    %307 = vsyncpa %s306, 1
    %308 = vsyncpa [#allocation6], 1
    %s309 = scalar_lea.sflag [#allocation6], 1
    %310 = vsyncpa %s309, 1
    %311 = vsyncpa [#allocation4], 1
    %s312 = scalar_lea.sflag [#allocation4], 1
    %313 = vsyncpa %s312, 1

</llo_original>
